<compile_context>
chip_gen: v7x
topology: tpu7x:2x2x1
jax: 0.10.0
libtpu: 0.0.40
codegen_flags: <defaults>
</compile_context>

<pallas_src>
import jax
import jax.numpy as jnp
import numpy as np
from jax.experimental import pallas as pl

# ---------------- small, module-consistent config ----------------
B = 2      # batch
L = 8      # sequence_length
C = 4      # input_channels (= output_channels, output_channels=None)
P = 6      # prediction_length (only row 0 is consumed by the module: x[:, 0])
FF = 32    # ff_dim
NB = 2     # num_blocks (module default is 6; kept small per instructions)
EPS = 1e-5 # BatchNorm eps

BL = B * L

# -------- packed-parameter slab layouts (compile-time column offsets) --------
# bf16 weight slab: every matmul weight operand, zero-padded to WROWS rows, concatenated along
# the lane (last) axis -> ONE HBM->VMEM DMA.  Total width <= 128 at NB=2 (one lane tile).
WT_OFF = 0                        # per-block temporal weight, block-diag over batch  (BL, BL)
W1_OFF = BL                       # per-block fc1 weight^T                            (C,  FF)
W2_OFF = BL + FF                  # per-block fc2 weight^T                            (FF, C)
W_PER_BLK = BL + FF + C           # 52 columns per block
WP_OFF = NB * W_PER_BLK           # projection row 0, block-diag over batch           (B,  BL)
WROWS = max(BL, FF, C, B)         # 32
WCOLS = WP_OFF + BL               # 120

# f32 affine slab: biases + eval-BatchNorm folded scale/shift, concatenated along lanes.
BT_OFF = 0                        # temporal bias               (BL, 1)
TNS_OFF = 1                       # temporal-norm scale         (BL, C)
TNH_OFF = 1 + C                   # temporal-norm shift         (BL, C)
FNS_OFF = 1 + 2 * C               # feature norm_before scale   (BL, C)
FNH_OFF = 1 + 3 * C               # feature norm_before shift   (BL, C)
B1_OFF = 1 + 4 * C                # fc1 bias (row 0 only)       (1, FF)
B2_OFF = 1 + 4 * C + FF           # fc2 bias (row 0 only)       (1, C)
A_PER_BLK = 1 + 4 * C + FF + C    # 53 columns per block
BP_OFF = NB * A_PER_BLK           # projection bias (scalar, row 0 only) folded into the slab
AROWS = BL                        # 16
ACOLS = BP_OFF + 1                # 107


def _gelu_tanh(x):
    # tanh-approximate GELU (tanh -> EUP slot); |err| vs exact erf GELU ~ few e-4, inside tol.
    return 0.5 * x * (1.0 + jnp.tanh(0.7978845608028654 * (x + 0.044715 * x * x * x)))


def _gelu_exact(x):
    # exact erf GELU, matching torch.nn.functional.gelu(approximate='none'); reference only.
    return 0.5 * x * (1.0 + jax.lax.erf(x * 0.7071067811865476))


# ---------------- the fused kernel (single invocation, whole batch resident in VMEM) ----------------
def tsmixer_kernel(x_ref, w_ref, a_ref, o_ref):
    x = x_ref[...]                                               # (B*L, C) f32, batch flattened
    for k in range(NB):                                          # static unroll (NB=2)
        wb = k * W_PER_BLK
        ab = k * A_PER_BLK
        # static slab slices (compile-time offsets)
        wt  = w_ref[:BL, wb + WT_OFF:wb + WT_OFF + BL]           # bf16 (BL, BL) block-diag
        w1t = w_ref[:C,  wb + W1_OFF:wb + W1_OFF + FF]           # bf16 (C,  FF)
        w2t = w_ref[:FF, wb + W2_OFF:wb + W2_OFF + C]            # bf16 (FF, C)
        bt  = a_ref[:,   ab + BT_OFF:ab + BT_OFF + 1]            # f32  (BL, 1)
        tns = a_ref[:,   ab + TNS_OFF:ab + TNS_OFF + C]          # f32  (BL, C)
        tnh = a_ref[:,   ab + TNH_OFF:ab + TNH_OFF + C]
        fns = a_ref[:,   ab + FNS_OFF:ab + FNS_OFF + C]
        fnh = a_ref[:,   ab + FNH_OFF:ab + FNH_OFF + C]
        b1  = a_ref[0:1, ab + B1_OFF:ab + B1_OFF + FF]           # f32  (1, FF)
        b2  = a_ref[0:1, ab + B2_OFF:ab + B2_OFF + C]            # f32  (1, C)

        # --- TemporalMixing: block-diag Linear over time (all B at once), GELU, residual,
        #     eval-mode TimeBatchNorm2d folded to scale/shift.  bf16 MXU, f32 accumulate. ---
        h = jnp.dot(wt, x.astype(jnp.bfloat16), preferred_element_type=jnp.float32) + bt
        x = x + _gelu_tanh(h)                                    # residual (dropout = identity)
        x = x * tns + tnh
        # --- FeatureMixing: norm_before -> Linear(C->FF) -> GELU -> Linear(FF->C) + skip ---
        hn = x * fns + fnh                                       # norm_before (eval BN), f32
        h1 = _gelu_tanh(
            jnp.dot(hn.astype(jnp.bfloat16), w1t, preferred_element_type=jnp.float32) + b1)
        x = x + jnp.dot(h1.astype(jnp.bfloat16), w2t, preferred_element_type=jnp.float32) + b2

    # --- temporal_projection: only the consumed prediction row (caller takes x[:, 0]) ---
    wpb = w_ref[:B, WP_OFF:WP_OFF + BL]                          # bf16 (B, BL)
    bp0 = a_ref[0:1, BP_OFF:BP_OFF + 1]                          # f32  (1, 1) scalar bias
    o_ref[...] = jnp.dot(wpb, x.astype(jnp.bfloat16),
                         preferred_element_type=jnp.float32) + bp0


# ---------------- wrapper ----------------
@jax.jit
def tsmixer_forward(x, wslab, aslab):
    x_flat = x.reshape(BL, C)                                    # contiguous, free in XLA
    return pl.pallas_call(
        tsmixer_kernel,
        out_shape=jax.ShapeDtypeStruct((B, C), jnp.float32),
    )(x_flat, wslab, aslab)                                      # no grid: single step, all VMEM


def prepare_params(params):
    """Pack torch-layout params into two contiguous slabs (one-time, host/trace side)."""
    (wt, bt, tns, tnh, fns, fnh, w1, b1, w2, b2, wp, bp) = params
    eye_b = jnp.eye(B, dtype=jnp.float32)

    # --- bf16 weight slab: matmul weight operands ---
    wslab = jnp.zeros((WROWS, WCOLS), jnp.float32)
    for k in range(NB):
        base = k * W_PER_BLK
        wt_blk = jnp.kron(eye_b, wt[k])                          # (B*L, B*L) block-diag (tiny-B trick)
        wslab = wslab.at[:BL, base + WT_OFF:base + WT_OFF + BL].set(wt_blk)
        wslab = wslab.at[:C,  base + W1_OFF:base + W1_OFF + FF].set(w1[k].T)
        wslab = wslab.at[:FF, base + W2_OFF:base + W2_OFF + C].set(w2[k].T)
    wp_blk = jnp.kron(eye_b, wp[0:1, :])                         # only row 0 is ever consumed
    wslab = wslab.at[:B, WP_OFF:WP_OFF + BL].set(wp_blk)
    wslab = wslab.astype(jnp.bfloat16)

    # --- f32 affine slab: biases + folded eval-BN scale/shift ---
    aslab = jnp.zeros((AROWS, ACOLS), jnp.float32)
    for k in range(NB):
        base = k * A_PER_BLK
        aslab = aslab.at[:, base + BT_OFF:base + BT_OFF + 1].set(jnp.tile(bt[k].T, (B, 1)))
        aslab = aslab.at[:, base + TNS_OFF:base + TNS_OFF + C].set(jnp.tile(tns[k], (B, 1)))
        aslab = aslab.at[:, base + TNH_OFF:base + TNH_OFF + C].set(jnp.tile(tnh[k], (B, 1)))
        aslab = aslab.at[:, base + FNS_OFF:base + FNS_OFF + C].set(jnp.tile(fns[k], (B, 1)))
        aslab = aslab.at[:, base + FNH_OFF:base + FNH_OFF + C].set(jnp.tile(fnh[k], (B, 1)))
        aslab = aslab.at[0:1, base + B1_OFF:base + B1_OFF + FF].set(b1[k])
        aslab = aslab.at[0:1, base + B2_OFF:base + B2_OFF + C].set(b2[k])
    aslab = aslab.at[0:1, BP_OFF:BP_OFF + 1].set(bp[:, 0:1])
    return wslab, aslab


# ---------------- pure-JAX reference (original module math, exact GELU, f32) ----------------
def tsmixer_ref(x, params):
    (wt, bt, tns, tnh, fns, fnh, w1, b1, w2, b2, wp, bp) = params
    for k in range(NB):
        xt = jnp.transpose(x, (0, 2, 1))                         # (B, C, L)
        h = _gelu_exact(xt @ wt[k].T + bt[k])
        x = x + jnp.transpose(h, (0, 2, 1))
        x = x * tns[k] + tnh[k]
        x_proj = x
        h = x * fns[k] + fnh[k]
        h = _gelu_exact(h @ w1[k].T + b1[k])
        h = h @ w2[k].T + b2[k]
        x = x_proj + h
    xt = jnp.transpose(x, (0, 2, 1))                             # (B, C, L)
    y = xt @ wp.T + bp                                           # (B, C, P)
    return jnp.transpose(y, (0, 2, 1))[:, 0]                     # (B, C)


# ---------------- deterministic parameter init (torch-layout) ----------------
def init_params(key):
    ks = jax.random.split(key, 16)
    wt = jax.random.normal(ks[0], (NB, L, L), jnp.float32) * 0.3
    bt = jax.random.normal(ks[1], (NB, 1, L), jnp.float32) * 0.1
    w1 = jax.random.normal(ks[2], (NB, FF, C), jnp.float32) * 0.3
    b1 = jax.random.normal(ks[3], (NB, 1, FF), jnp.float32) * 0.1
    w2 = jax.random.normal(ks[4], (NB, C, FF), jnp.float32) * 0.3
    b2 = jax.random.normal(ks[5], (NB, 1, C), jnp.float32) * 0.1
    wp = jax.random.normal(ks[6], (P, L), jnp.float32) * 0.3
    bp = jax.random.normal(ks[7], (1, P), jnp.float32) * 0.1

    def bn_fold(k1, k2, k3, k4):
        # TimeBatchNorm2d over flattened (L*C) features, eval mode -> per-(l,c) affine
        mean = jax.random.normal(k1, (NB, L, C), jnp.float32) * 0.1
        var = jax.random.uniform(k2, (NB, L, C), jnp.float32, minval=0.5, maxval=1.5)
        gamma = 1.0 + 0.1 * jax.random.normal(k3, (NB, L, C), jnp.float32)
        beta = 0.1 * jax.random.normal(k4, (NB, L, C), jnp.float32)
        scale = gamma / jnp.sqrt(var + EPS)
        shift = beta - mean * scale
        return scale, shift

    tns, tnh = bn_fold(ks[8], ks[9], ks[10], ks[11])
    fns, fnh = bn_fold(ks[12], ks[13], ks[14], ks[15])
    return (wt, bt, tns, tnh, fns, fnh, w1, b1, w2, b2, wp, bp)


if __name__ == "__main__":
    key = jax.random.PRNGKey(0)
    kx, kp = jax.random.split(key)
    x_hist = jax.random.normal(kx, (B, L, C), jnp.float32)
    params = init_params(kp)
    wslab, aslab = prepare_params(params)                        # one-time packing

    out = tsmixer_forward(x_hist, wslab, aslab)
    out = jax.block_until_ready(out)

    ref = tsmixer_ref(x_hist, params)
    # 2e-2 tolerance covers the approved tanh-GELU approximation + bf16 MXU operands
    # (f32 accumulation) + TPU default matmul precision.
    np.testing.assert_allclose(np.asarray(out), np.asarray(ref), rtol=2e-2, atol=2e-2)
    assert out.shape == (B, C)
    print("KERNEL_OK")
</pallas_src>

<mosaic_0001>
module attributes {stable_mosaic.version = 11 : i64} {
  func.func @tsmixer_kernel(%arg0: memref<16x4xf32, #tpu.memory_space<vmem>>, %arg1: memref<32x120xbf16, #tpu.memory_space<vmem>>, %arg2: memref<16x107xf32, #tpu.memory_space<vmem>>, %arg3: memref<2x4xf32, #tpu.memory_space<vmem>>) attributes {dimension_semantics = [], scalar_prefetch = 0 : i64, scratch_operands = 0 : i64, tpu.core_type = #tpu.core_type<tc>} {
    %c0 = arith.constant 0 : index
    %c0_0 = arith.constant 0 : index
    %0 = vector.load %arg0[%c0, %c0_0] : memref<16x4xf32, #tpu.memory_space<vmem>>, vector<16x4xf32>
    %c0_1 = arith.constant 0 : index
    %c0_2 = arith.constant 0 : index
    %1 = vector.load %arg1[%c0_1, %c0_2] : memref<32x120xbf16, #tpu.memory_space<vmem>>, vector<16x16xbf16>
    %c0_3 = arith.constant 0 : index
    %c16 = arith.constant 16 : index
    %2 = vector.load %arg1[%c0_3, %c16] : memref<32x120xbf16, #tpu.memory_space<vmem>>, vector<4x32xbf16>
    %c0_4 = arith.constant 0 : index
    %c48 = arith.constant 48 : index
    %3 = vector.load %arg1[%c0_4, %c48] : memref<32x120xbf16, #tpu.memory_space<vmem>>, vector<32x4xbf16>
    %c0_5 = arith.constant 0 : index
    %c0_6 = arith.constant 0 : index
    %4 = vector.load %arg2[%c0_5, %c0_6] : memref<16x107xf32, #tpu.memory_space<vmem>>, vector<16x1xf32>
    %c0_7 = arith.constant 0 : index
    %c1 = arith.constant 1 : index
    %5 = vector.load %arg2[%c0_7, %c1] : memref<16x107xf32, #tpu.memory_space<vmem>>, vector<16x4xf32>
    %c0_8 = arith.constant 0 : index
    %c5 = arith.constant 5 : index
    %6 = vector.load %arg2[%c0_8, %c5] : memref<16x107xf32, #tpu.memory_space<vmem>>, vector<16x4xf32>
    %c0_9 = arith.constant 0 : index
    %c9 = arith.constant 9 : index
    %7 = vector.load %arg2[%c0_9, %c9] : memref<16x107xf32, #tpu.memory_space<vmem>>, vector<16x4xf32>
    %c0_10 = arith.constant 0 : index
    %c13 = arith.constant 13 : index
    %8 = vector.load %arg2[%c0_10, %c13] : memref<16x107xf32, #tpu.memory_space<vmem>>, vector<16x4xf32>
    %c0_11 = arith.constant 0 : index
    %c17 = arith.constant 17 : index
    %9 = vector.load %arg2[%c0_11, %c17] : memref<16x107xf32, #tpu.memory_space<vmem>>, vector<1x32xf32>
    %c0_12 = arith.constant 0 : index
    %c49 = arith.constant 49 : index
    %10 = vector.load %arg2[%c0_12, %c49] : memref<16x107xf32, #tpu.memory_space<vmem>>, vector<1x4xf32>
    %11 = arith.truncf %0 : vector<16x4xf32> to vector<16x4xbf16>
    %cst = arith.constant dense<0.000000e+00> : vector<16x4xf32>
    %12 = tpu.matmul %1, %11, %cst {dimension_numbers = #tpu.dot_dimension_numbers<[1], [0], [0], [1], [0, 0, 1, 1], [], []>} : vector<16x16xbf16>, vector<16x4xbf16>, vector<16x4xf32> -> vector<16x4xf32>
    %13 = vector.broadcast %4 : vector<16x1xf32> to vector<16x4xf32>
    %14 = arith.addf %12, %13 : vector<16x4xf32>
    %cst_13 = arith.constant 5.000000e-01 : f32
    %15 = vector.broadcast %cst_13 : f32 to vector<16x4xf32>
    %16 = arith.mulf %15, %14 : vector<16x4xf32>
    %cst_14 = arith.constant 4.471500e-02 : f32
    %17 = vector.broadcast %cst_14 : f32 to vector<16x4xf32>
    %18 = arith.mulf %17, %14 : vector<16x4xf32>
    %19 = arith.mulf %18, %14 : vector<16x4xf32>
    %20 = arith.mulf %19, %14 : vector<16x4xf32>
    %21 = arith.addf %14, %20 : vector<16x4xf32>
    %cst_15 = arith.constant 0.797884583 : f32
    %22 = vector.broadcast %cst_15 : f32 to vector<16x4xf32>
    %23 = arith.mulf %22, %21 : vector<16x4xf32>
    %24 = math.tanh %23 : vector<16x4xf32>
    %cst_16 = arith.constant 1.000000e+00 : f32
    %25 = vector.broadcast %cst_16 : f32 to vector<16x4xf32>
    %26 = arith.addf %25, %24 : vector<16x4xf32>
    %27 = arith.mulf %16, %26 : vector<16x4xf32>
    %28 = arith.addf %0, %27 : vector<16x4xf32>
    %29 = arith.mulf %28, %5 : vector<16x4xf32>
    %30 = arith.addf %29, %6 : vector<16x4xf32>
    %31 = arith.mulf %30, %7 : vector<16x4xf32>
    %32 = arith.addf %31, %8 : vector<16x4xf32>
    %33 = arith.truncf %32 : vector<16x4xf32> to vector<16x4xbf16>
    %cst_17 = arith.constant dense<0.000000e+00> : vector<16x32xf32>
    %34 = tpu.matmul %33, %2, %cst_17 {dimension_numbers = #tpu.dot_dimension_numbers<[1], [0], [0], [1], [0, 0, 1, 1], [], []>} : vector<16x4xbf16>, vector<4x32xbf16>, vector<16x32xf32> -> vector<16x32xf32>
    %35 = vector.broadcast %9 : vector<1x32xf32> to vector<16x32xf32>
    %36 = arith.addf %34, %35 : vector<16x32xf32>
    %cst_18 = arith.constant 5.000000e-01 : f32
    %37 = vector.broadcast %cst_18 : f32 to vector<16x32xf32>
    %38 = arith.mulf %37, %36 : vector<16x32xf32>
    %cst_19 = arith.constant 4.471500e-02 : f32
    %39 = vector.broadcast %cst_19 : f32 to vector<16x32xf32>
    %40 = arith.mulf %39, %36 : vector<16x32xf32>
    %41 = arith.mulf %40, %36 : vector<16x32xf32>
    %42 = arith.mulf %41, %36 : vector<16x32xf32>
    %43 = arith.addf %36, %42 : vector<16x32xf32>
    %cst_20 = arith.constant 0.797884583 : f32
    %44 = vector.broadcast %cst_20 : f32 to vector<16x32xf32>
    %45 = arith.mulf %44, %43 : vector<16x32xf32>
    %46 = math.tanh %45 : vector<16x32xf32>
    %cst_21 = arith.constant 1.000000e+00 : f32
    %47 = vector.broadcast %cst_21 : f32 to vector<16x32xf32>
    %48 = arith.addf %47, %46 : vector<16x32xf32>
    %49 = arith.mulf %38, %48 : vector<16x32xf32>
    %50 = arith.truncf %49 : vector<16x32xf32> to vector<16x32xbf16>
    %cst_22 = arith.constant dense<0.000000e+00> : vector<16x4xf32>
    %51 = tpu.matmul %50, %3, %cst_22 {dimension_numbers = #tpu.dot_dimension_numbers<[1], [0], [0], [1], [0, 0, 1, 1], [], []>} : vector<16x32xbf16>, vector<32x4xbf16>, vector<16x4xf32> -> vector<16x4xf32>
    %52 = arith.addf %30, %51 : vector<16x4xf32>
    %53 = vector.broadcast %10 : vector<1x4xf32> to vector<16x4xf32>
    %54 = arith.addf %52, %53 : vector<16x4xf32>
    %c0_23 = arith.constant 0 : index
    %c52 = arith.constant 52 : index
    %55 = vector.load %arg1[%c0_23, %c52] : memref<32x120xbf16, #tpu.memory_space<vmem>>, vector<16x16xbf16>
    %c0_24 = arith.constant 0 : index
    %c68 = arith.constant 68 : index
    %56 = vector.load %arg1[%c0_24, %c68] : memref<32x120xbf16, #tpu.memory_space<vmem>>, vector<4x32xbf16>
    %c0_25 = arith.constant 0 : index
    %c100 = arith.constant 100 : index
    %57 = vector.load %arg1[%c0_25, %c100] : memref<32x120xbf16, #tpu.memory_space<vmem>>, vector<32x4xbf16>
    %c0_26 = arith.constant 0 : index
    %c53 = arith.constant 53 : index
    %58 = vector.load %arg2[%c0_26, %c53] : memref<16x107xf32, #tpu.memory_space<vmem>>, vector<16x1xf32>
    %c0_27 = arith.constant 0 : index
    %c54 = arith.constant 54 : index
    %59 = vector.load %arg2[%c0_27, %c54] : memref<16x107xf32, #tpu.memory_space<vmem>>, vector<16x4xf32>
    %c0_28 = arith.constant 0 : index
    %c58 = arith.constant 58 : index
    %60 = vector.load %arg2[%c0_28, %c58] : memref<16x107xf32, #tpu.memory_space<vmem>>, vector<16x4xf32>
    %c0_29 = arith.constant 0 : index
    %c62 = arith.constant 62 : index
    %61 = vector.load %arg2[%c0_29, %c62] : memref<16x107xf32, #tpu.memory_space<vmem>>, vector<16x4xf32>
    %c0_30 = arith.constant 0 : index
    %c66 = arith.constant 66 : index
    %62 = vector.load %arg2[%c0_30, %c66] : memref<16x107xf32, #tpu.memory_space<vmem>>, vector<16x4xf32>
    %c0_31 = arith.constant 0 : index
    %c70 = arith.constant 70 : index
    %63 = vector.load %arg2[%c0_31, %c70] : memref<16x107xf32, #tpu.memory_space<vmem>>, vector<1x32xf32>
    %c0_32 = arith.constant 0 : index
    %c102 = arith.constant 102 : index
    %64 = vector.load %arg2[%c0_32, %c102] : memref<16x107xf32, #tpu.memory_space<vmem>>, vector<1x4xf32>
    %65 = arith.truncf %54 : vector<16x4xf32> to vector<16x4xbf16>
    %cst_33 = arith.constant dense<0.000000e+00> : vector<16x4xf32>
    %66 = tpu.matmul %55, %65, %cst_33 {dimension_numbers = #tpu.dot_dimension_numbers<[1], [0], [0], [1], [0, 0, 1, 1], [], []>} : vector<16x16xbf16>, vector<16x4xbf16>, vector<16x4xf32> -> vector<16x4xf32>
    %67 = vector.broadcast %58 : vector<16x1xf32> to vector<16x4xf32>
    %68 = arith.addf %66, %67 : vector<16x4xf32>
    %cst_34 = arith.constant 5.000000e-01 : f32
    %69 = vector.broadcast %cst_34 : f32 to vector<16x4xf32>
    %70 = arith.mulf %69, %68 : vector<16x4xf32>
    %cst_35 = arith.constant 4.471500e-02 : f32
    %71 = vector.broadcast %cst_35 : f32 to vector<16x4xf32>
    %72 = arith.mulf %71, %68 : vector<16x4xf32>
    %73 = arith.mulf %72, %68 : vector<16x4xf32>
    %74 = arith.mulf %73, %68 : vector<16x4xf32>
    %75 = arith.addf %68, %74 : vector<16x4xf32>
    %cst_36 = arith.constant 0.797884583 : f32
    %76 = vector.broadcast %cst_36 : f32 to vector<16x4xf32>
    %77 = arith.mulf %76, %75 : vector<16x4xf32>
    %78 = math.tanh %77 : vector<16x4xf32>
    %cst_37 = arith.constant 1.000000e+00 : f32
    %79 = vector.broadcast %cst_37 : f32 to vector<16x4xf32>
    %80 = arith.addf %79, %78 : vector<16x4xf32>
    %81 = arith.mulf %70, %80 : vector<16x4xf32>
    %82 = arith.addf %54, %81 : vector<16x4xf32>
    %83 = arith.mulf %82, %59 : vector<16x4xf32>
    %84 = arith.addf %83, %60 : vector<16x4xf32>
    %85 = arith.mulf %84, %61 : vector<16x4xf32>
    %86 = arith.addf %85, %62 : vector<16x4xf32>
    %87 = arith.truncf %86 : vector<16x4xf32> to vector<16x4xbf16>
    %cst_38 = arith.constant dense<0.000000e+00> : vector<16x32xf32>
    %88 = tpu.matmul %87, %56, %cst_38 {dimension_numbers = #tpu.dot_dimension_numbers<[1], [0], [0], [1], [0, 0, 1, 1], [], []>} : vector<16x4xbf16>, vector<4x32xbf16>, vector<16x32xf32> -> vector<16x32xf32>
    %89 = vector.broadcast %63 : vector<1x32xf32> to vector<16x32xf32>
    %90 = arith.addf %88, %89 : vector<16x32xf32>
    %cst_39 = arith.constant 5.000000e-01 : f32
    %91 = vector.broadcast %cst_39 : f32 to vector<16x32xf32>
    %92 = arith.mulf %91, %90 : vector<16x32xf32>
    %cst_40 = arith.constant 4.471500e-02 : f32
    %93 = vector.broadcast %cst_40 : f32 to vector<16x32xf32>
    %94 = arith.mulf %93, %90 : vector<16x32xf32>
    %95 = arith.mulf %94, %90 : vector<16x32xf32>
    %96 = arith.mulf %95, %90 : vector<16x32xf32>
    %97 = arith.addf %90, %96 : vector<16x32xf32>
    %cst_41 = arith.constant 0.797884583 : f32
    %98 = vector.broadcast %cst_41 : f32 to vector<16x32xf32>
    %99 = arith.mulf %98, %97 : vector<16x32xf32>
    %100 = math.tanh %99 : vector<16x32xf32>
    %cst_42 = arith.constant 1.000000e+00 : f32
    %101 = vector.broadcast %cst_42 : f32 to vector<16x32xf32>
    %102 = arith.addf %101, %100 : vector<16x32xf32>
    %103 = arith.mulf %92, %102 : vector<16x32xf32>
    %104 = arith.truncf %103 : vector<16x32xf32> to vector<16x32xbf16>
    %cst_43 = arith.constant dense<0.000000e+00> : vector<16x4xf32>
    %105 = tpu.matmul %104, %57, %cst_43 {dimension_numbers = #tpu.dot_dimension_numbers<[1], [0], [0], [1], [0, 0, 1, 1], [], []>} : vector<16x32xbf16>, vector<32x4xbf16>, vector<16x4xf32> -> vector<16x4xf32>
    %106 = arith.addf %84, %105 : vector<16x4xf32>
    %107 = vector.broadcast %64 : vector<1x4xf32> to vector<16x4xf32>
    %108 = arith.addf %106, %107 : vector<16x4xf32>
    %c0_44 = arith.constant 0 : index
    %c104 = arith.constant 104 : index
    %109 = vector.load %arg1[%c0_44, %c104] : memref<32x120xbf16, #tpu.memory_space<vmem>>, vector<2x16xbf16>
    %c0_45 = arith.constant 0 : index
    %c106 = arith.constant 106 : index
    %110 = vector.load %arg2[%c0_45, %c106] : memref<16x107xf32, #tpu.memory_space<vmem>>, vector<1x1xf32>
    %111 = arith.truncf %108 : vector<16x4xf32> to vector<16x4xbf16>
    %cst_46 = arith.constant dense<0.000000e+00> : vector<2x4xf32>
    %112 = tpu.matmul %109, %111, %cst_46 {dimension_numbers = #tpu.dot_dimension_numbers<[1], [0], [0], [1], [0, 0, 1, 1], [], []>} : vector<2x16xbf16>, vector<16x4xbf16>, vector<2x4xf32> -> vector<2x4xf32>
    %113 = vector.broadcast %110 : vector<1x1xf32> to vector<2x4xf32>
    %114 = arith.addf %112, %113 : vector<2x4xf32>
    %c0_47 = arith.constant 0 : index
    %c0_48 = arith.constant 0 : index
    %115 = vector.load %arg3[%c0_47, %c0_48] : memref<2x4xf32, #tpu.memory_space<vmem>>, vector<2x4xf32>
    tpu.vector_store %arg3[%c0_47, %c0_48], %114 {strides = array<i32>} : memref<2x4xf32, #tpu.memory_space<vmem>>, vector<2x4xf32>,
    return
  }
}

</mosaic_0001>

<llo_original>
// kernel: tsmixer_forward.1
$region0: #{tsmixer_forward.1}
  #allocation0 [shape = 'u32[]', space=smem, size = 0x4, offset = 0x4, fixed_abs, tag = 'smem constant byte address 0x4 - core index']
  #allocation1 [shape = 'u32[144,128]{1,0:T(1,128)}', space=vmem, size = 0x12000, scoped, tag = 'internal scratch']
  %s0 = inlined_call_operand.vmem [shape: f32[16,4], index: 0, kind: input, shape index: {}]
  %s1 = inlined_call_operand.vmem [shape: bf16[32,120], index: 1, kind: input, shape index: {}]
  %s2 = inlined_call_operand.vmem [shape: f32[16,107], index: 2, kind: input, shape index: {}]
  %s3 = inlined_call_operand.hbm [shape: f32[2,4], index: 3, kind: output, shape index: {}]
  %s4 = sld [smem:[#allocation0]]
  $region22: #{tsmixer_forward.1} parent=0
    _
  %s6 = ssub.s32 1, %s4
  %s7 = scalar_select 0, %s6, %s4
  $region1: #{tsmixer_forward.1} parent=0
    #allocation2 [shape = 'u8[1024]{0}', space=vmem, size = 0x400, scoped, tag = 'output window, operand 0, single buffered']
    #allocation3 [shape = 's32[1]{0}', space=sflag, size = 0x4, scoped, tag = 'scoped memory for tsmixer_forward.1']
    %8 = vsyncpa [#allocation3], 0
    // Predicated region
    $region2: #{tsmixer_forward.1} parent=1 // pred_check
      _
    $region3: #{tsmixer_forward.1} parent=1 // pred_check_branch
      %10 = sbr.rel (0) target = $region5
    $region4: #{tsmixer_forward.1} parent=1 // pred_region
      _
    $region5: #{tsmixer_forward.1} parent=1 // pred_fallthru
      _
    // Predicated region
    $region6: #{tsmixer_forward.1} parent=1 // pred_check
      _
    $region7: #{tsmixer_forward.1} parent=1 // pred_check_branch
      %12 = sbr.rel (0) target = $region9
    $region8: #{tsmixer_forward.1} parent=1 // pred_region
      _
    $region9: #{tsmixer_forward.1} parent=1 // pred_fallthru
      _
    // Predicated region
    $region10: #{tsmixer_forward.1} parent=1 // pred_check
      _
    $region11: #{tsmixer_forward.1} parent=1 // pred_check_branch
      %14 = sbr.rel (0) target = $region13
    $region12: #{tsmixer_forward.1} parent=1 // pred_region
      _
    $region13: #{tsmixer_forward.1} parent=1 // pred_fallthru
      _
    %v16 = vld [vmem:[%s0] sm:$0xff]
    %v17 = vld [vmem:[%s0 + $0x8] sm:$0xff]
    %v18 = vld [vmem:[%s1] sm:$0xf]
    %v19 = vld [vmem:[%s1 + $0x4] sm:$0xf]
    %v20 = vld [vmem:[%s1] sm:$0x3]
    %v21 = vld [vmem:[%s1 + $0x8] sm:$0xf]
    %v22 = vld [vmem:[%s1 + $0xc] sm:$0xf]
    %v23 = vld [vmem:[%s2] sm:$0xff]
    %v24 = vld [vmem:[%s2 + $0x8] sm:$0xff]
    %v25 = vld [vmem:[%s2] sm:$0x1]
    %v26 = vpack.c.bf16 %v17, %v16
    %28 = vset.pattern.permute.xlu0 0
    %29 = vperm.xlu0 %28, %v23
    %v30 = vpop.permute.xlu0 %29
    %33 = vset.pattern.permute.xlu0 0
    %34 = vperm.xlu0 %33, %v24
    %v35 = vpop.permute.xlu0 %34
    %v39 = vunpack.c.l.b16 %v18
    %v40 = vunpack.c.l.b16 %v19
    %v41 = vpack.c.b16 %v40, %v39
    %vm42 = vcmask 130048
    %v44 = vsel %vm42, %v41, 0
    %46 = vmatprep.subr.bf16.mxu0 0
    %47 = vmatpush1.bf16.msra.mxu0 %v26
    %48 = vmatprep.subr.bf16.mxu0 0
    %49 = vmatpush1.bf16.msra.mxu0 0
    %50 = vmatprep.subr.bf16.mxu0 0
    %51 = vmatpush1.bf16.msra.mxu0 0
    %52 = vmatprep.subr.bf16.mxu0 0
    %53 = vmatpush1.bf16.msra.mxu0 0
    %54 = vmatprep.subr.bf16.mxu0 0
    %55 = vmatpush1.bf16.msra.mxu0 0
    %56 = vmatprep.subr.bf16.mxu0 0
    %57 = vmatpush1.bf16.msra.mxu0 0
    %58 = vmatprep.subr.bf16.mxu0 0
    %59 = vmatpush1.bf16.msra.mxu0 0
    %60 = vmatprep.subr.bf16.mxu0 0
    %61 = vmatpush1.bf16.msra.mxu0 0
    %62 = vmatprep.subr.bf16.mxu0 0
    %63 = vmatpush1.bf16.msra.mxu0 0
    %64 = vmatprep.subr.bf16.mxu0 0
    %65 = vmatpush1.bf16.msra.mxu0 0
    %66 = vmatprep.subr.bf16.mxu0 0
    %67 = vmatpush1.bf16.msra.mxu0 0
    %68 = vmatprep.subr.bf16.mxu0 0
    %69 = vmatpush1.bf16.msra.mxu0 0
    %70 = vmatprep.subr.bf16.mxu0 0
    %71 = vmatpush1.bf16.msra.mxu0 0
    %72 = vmatprep.subr.bf16.mxu0 0
    %73 = vmatpush1.bf16.msra.mxu0 0
    %74 = vmatprep.subr.bf16.mxu0 0
    %75 = vmatpush1.bf16.msra.mxu0 0
    %76 = vmatprep.subr.bf16.mxu0 0
    %77 = vmatpush1.bf16.msra.mxu0 0
    %78 = vmatprep.mubr.bf16.mxu0 0
    %79 = vmatmul.mubr.bf16.gmra.mrb[0].mxu0 %v44
    %v80 = vpop.f32.mrb[0].mxu0
    %v81 = vadd.f32 %v30, %v80
    %v82 = vpop.f32.mrb[0].mxu0
    %v83 = vpop.f32.mrb[0].mxu0
    %v84 = vadd.f32 %v35, %v83
    %v85 = vpop.f32.mrb[0].mxu0
    %86 = vdwg.mxu0
    %v87 = vmul.f32 %v81, 0.5
    %v88 = vmul.f32 %v84, 0.5
    %v89 = vmul.f32 %v81, 0.044715
    %v90 = vmul.f32 %v84, 0.044715
    %v91 = vmul.f32 %v89, %v81
    %v92 = vmul.f32 %v90, %v84
    %v93 = vmul.f32 %v91, %v81
    %v94 = vmul.f32 %v92, %v84
    %v95 = vadd.f32 %v81, %v93
    %v96 = vadd.f32 %v84, %v94
    %v97 = vmul.f32 %v95, 0.7978846
    %v98 = vmul.f32 %v96, 0.7978846
    %v99 = vtanh.pop %v97
    %v100 = vtanh.pop %v98
    %v101 = vadd.f32 %v99, 1.0
    %v102 = vadd.f32 %v100, 1.0
    %v103 = vmul.f32 %v87, %v101
    %v104 = vmul.f32 %v88, %v102
    %v105 = vadd.f32 %v16, %v103
    %v106 = vadd.f32 %v17, %v104
    %107 = vrot.lane.b32.xlu0 %v23, 127
    %v108 = vpop.permute.xlu0 %107
    %109 = vrot.lane.b32.xlu0 %v24, 127
    %v110 = vpop.permute.xlu0 %109
    %v113 = vmul.f32 %v105, %v108
    %v114 = vmul.f32 %v106, %v110
    %115 = vrot.lane.b32.xlu0 %v23, 123
    %v116 = vpop.permute.xlu0 %115
    %117 = vrot.lane.b32.xlu0 %v24, 123
    %v118 = vpop.permute.xlu0 %117
    %v121 = vadd.f32 %v113, %v116
    %v122 = vadd.f32 %v114, %v118
    %123 = vrot.lane.b32.xlu0 %v23, 119
    %v124 = vpop.permute.xlu0 %123
    %125 = vrot.lane.b32.xlu0 %v24, 119
    %v126 = vpop.permute.xlu0 %125
    %v129 = vmul.f32 %v121, %v124
    %v130 = vmul.f32 %v122, %v126
    %131 = vrot.lane.b32.xlu0 %v23, 115
    %v132 = vpop.permute.xlu0 %131
    %133 = vrot.lane.b32.xlu0 %v24, 115
    %v134 = vpop.permute.xlu0 %133
    %v137 = vadd.f32 %v129, %v132
    %v138 = vadd.f32 %v130, %v134
    %v139 = vpack.c.bf16 %v138, %v137
    %v140 = vlaneseq
    %v141 = vshrl.u32 %v140, 7
    %v142 = vsub.s32 0, %v141
    %v143 = vrot.slane %v25, %v142
    %v145 = vunpack.c.l.b16 %v20
    %v146 = vpack.c.b16 %v145, %v145
    %147 = vrot.lane.b32.xlu0 %v146, 112
    %v148 = vpop.permute.xlu0 %147
    %150 = vrot.lane.b32.xlu0 %v143, 111
    %v151 = vpop.permute.xlu0 %150
    %vm153 = vcmask 31744
    %v155 = vsel %vm153, %v139, 0
    %vm157 = vcmask 1041408
    %v159 = vsel %vm157, %v148, 0
    %161 = vmatprep.subr.bf16.mxu0 0
    %162 = vmatpush1.bf16.msra.mxu0 %v159
    %163 = vmatprep.subr.bf16.mxu0 0
    %164 = vmatpush1.bf16.msra.mxu0 0
    %165 = vmatprep.subr.bf16.mxu0 0
    %166 = vmatpush1.bf16.msra.mxu0 0
    %167 = vmatprep.subr.bf16.mxu0 0
    %168 = vmatpush1.bf16.msra.mxu0 0
    %169 = vmatprep.subr.bf16.mxu0 0
    %170 = vmatpush1.bf16.msra.mxu0 0
    %171 = vmatprep.subr.bf16.mxu0 0
    %172 = vmatpush1.bf16.msra.mxu0 0
    %173 = vmatprep.subr.bf16.mxu0 0
    %174 = vmatpush1.bf16.msra.mxu0 0
    %175 = vmatprep.subr.bf16.mxu0 0
    %176 = vmatpush1.bf16.msra.mxu0 0
    %177 = vmatprep.subr.bf16.mxu0 0
    %178 = vmatpush1.bf16.msra.mxu0 0
    %179 = vmatprep.subr.bf16.mxu0 0
    %180 = vmatpush1.bf16.msra.mxu0 0
    %181 = vmatprep.subr.bf16.mxu0 0
    %182 = vmatpush1.bf16.msra.mxu0 0
    %183 = vmatprep.subr.bf16.mxu0 0
    %184 = vmatpush1.bf16.msra.mxu0 0
    %185 = vmatprep.subr.bf16.mxu0 0
    %186 = vmatpush1.bf16.msra.mxu0 0
    %187 = vmatprep.subr.bf16.mxu0 0
    %188 = vmatpush1.bf16.msra.mxu0 0
    %189 = vmatprep.subr.bf16.mxu0 0
    %190 = vmatpush1.bf16.msra.mxu0 0
    %191 = vmatprep.subr.bf16.mxu0 0
    %192 = vmatpush1.bf16.msra.mxu0 0
    %193 = vmatprep.mubr.bf16.mxu0 0
    %194 = vmatmul.mubr.bf16.gmra.mrb[0].mxu0 %v155
    %v195 = vpop.f32.mrb[0].mxu0
    %v196 = vadd.f32 %v151, %v195
    %v197 = vpop.f32.mrb[0].mxu0
    %v198 = vpop.f32.mrb[0].mxu0
    %v199 = vadd.f32 %v151, %v198
    %v200 = vpop.f32.mrb[0].mxu0
    %201 = vdwg.mxu0
    %v202 = vmul.f32 %v196, 0.5
    %v203 = vmul.f32 %v199, 0.5
    %v204 = vmul.f32 %v196, 0.044715
    %v205 = vmul.f32 %v199, 0.044715
    %v206 = vmul.f32 %v204, %v196
    %v207 = vmul.f32 %v205, %v199
    %v208 = vmul.f32 %v206, %v196
    %v209 = vmul.f32 %v207, %v199
    %v210 = vadd.f32 %v196, %v208
    %v211 = vadd.f32 %v199, %v209
    %v212 = vmul.f32 %v210, 0.7978846
    %v213 = vmul.f32 %v211, 0.7978846
    %v214 = vtanh.pop %v212
    %v215 = vtanh.pop %v213
    %v216 = vadd.f32 %v214, 1.0
    %v217 = vadd.f32 %v215, 1.0
    %v218 = vmul.f32 %v202, %v216
    %v219 = vmul.f32 %v203, %v217
    %v220 = vpack.c.bf16 %v219, %v218
    %v223 = vunpack.c.l.b16 %v21
    %v224 = vunpack.c.l.b16 %v22
    %v225 = vpack.c.b16 %v224, %v223
    %226 = vrot.lane.b32.xlu0 %v41, 80
    %v227 = vpop.permute.xlu0 %226
    %228 = vrot.lane.b32.xlu0 %v225, 80
    %v229 = vpop.permute.xlu0 %228
    %vm232 = vcmask 261120
    %v234 = vsel %vm232, %v220, 0
    %236 = vmatprep.subr.bf16.mxu0 0
    %237 = vmatpush1.bf16.msra.mxu0 %v227
    %238 = vmatprep.subr.bf16.mxu0 0
    %239 = vmatpush1.bf16.msra.mxu0 %v229
    %240 = vmatprep.subr.bf16.mxu0 0
    %241 = vmatpush1.bf16.msra.mxu0 0
    %242 = vmatprep.subr.bf16.mxu0 0
    %243 = vmatpush1.bf16.msra.mxu0 0
    %244 = vmatprep.subr.bf16.mxu0 0
    %245 = vmatpush1.bf16.msra.mxu0 0
    %246 = vmatprep.subr.bf16.mxu0 0
    %247 = vmatpush1.bf16.msra.mxu0 0
    %248 = vmatprep.subr.bf16.mxu0 0
    %249 = vmatpush1.bf16.msra.mxu0 0
    %250 = vmatprep.subr.bf16.mxu0 0
    %251 = vmatpush1.bf16.msra.mxu0 0
    %252 = vmatprep.subr.bf16.mxu0 0
    %253 = vmatpush1.bf16.msra.mxu0 0
    %254 = vmatprep.subr.bf16.mxu0 0
    %255 = vmatpush1.bf16.msra.mxu0 0
    %256 = vmatprep.subr.bf16.mxu0 0
    %257 = vmatpush1.bf16.msra.mxu0 0
    %258 = vmatprep.subr.bf16.mxu0 0
    %259 = vmatpush1.bf16.msra.mxu0 0
    %260 = vmatprep.subr.bf16.mxu0 0
    %261 = vmatpush1.bf16.msra.mxu0 0
    %262 = vmatprep.subr.bf16.mxu0 0
    %263 = vmatpush1.bf16.msra.mxu0 0
    %264 = vmatprep.subr.bf16.mxu0 0
    %265 = vmatpush1.bf16.msra.mxu0 0
    %266 = vmatprep.subr.bf16.mxu0 0
    %267 = vmatpush1.bf16.msra.mxu0 0
    %268 = vmatprep.mubr.bf16.mxu0 0
    %269 = vmatmul.mubr.bf16.gmra.mrb[0].mxu0 %v234
    %v270 = vpop.f32.mrb[0].mxu0
    %v271 = vadd.f32 0.0, %v270
    %v272 = vpop.f32.mrb[0].mxu0
    %v273 = vpop.f32.mrb[0].mxu0
    %v274 = vadd.f32 0.0, %v273
    %v275 = vpop.f32.mrb[0].mxu0
    %276 = vdwg.mxu0
    %v277 = vadd.f32 %v121, %v271
    %v278 = vadd.f32 %v122, %v274
    %279 = vrot.lane.b32.xlu0 %v143, 79
    %v280 = vpop.permute.xlu0 %279
    %v282 = vadd.f32 %v277, %v280
    %v283 = vadd.f32 %v278, %v280
    %v284 = vpack.c.bf16 %v283, %v282
    %285 = vset.pattern.permute.xlu0 53
    %286 = vperm.xlu0 %285, %v23
    %v287 = vpop.permute.xlu0 %286
    %289 = vset.pattern.permute.xlu0 53
    %290 = vperm.xlu0 %289, %v24
    %v291 = vpop.permute.xlu0 %290
    %293 = vrot.lane.b32.xlu0 %v41, 76
    %v294 = vpop.permute.xlu0 %293
    %v296 = vsel %vm42, %v294, 0
    %298 = vmatprep.subr.bf16.mxu0 0
    %299 = vmatpush1.bf16.msra.mxu0 %v284
    %300 = vmatprep.subr.bf16.mxu0 0
    %301 = vmatpush1.bf16.msra.mxu0 0
    %302 = vmatprep.subr.bf16.mxu0 0
    %303 = vmatpush1.bf16.msra.mxu0 0
    %304 = vmatprep.subr.bf16.mxu0 0
    %305 = vmatpush1.bf16.msra.mxu0 0
    %306 = vmatprep.subr.bf16.mxu0 0
    %307 = vmatpush1.bf16.msra.mxu0 0
    %308 = vmatprep.subr.bf16.mxu0 0
    %309 = vmatpush1.bf16.msra.mxu0 0
    %310 = vmatprep.subr.bf16.mxu0 0
    %311 = vmatpush1.bf16.msra.mxu0 0
    %312 = vmatprep.subr.bf16.mxu0 0
    %313 = vmatpush1.bf16.msra.mxu0 0
    %314 = vmatprep.subr.bf16.mxu0 0
    %315 = vmatpush1.bf16.msra.mxu0 0
    %316 = vmatprep.subr.bf16.mxu0 0
    %317 = vmatpush1.bf16.msra.mxu0 0
    %318 = vmatprep.subr.bf16.mxu0 0
    %319 = vmatpush1.bf16.msra.mxu0 0
    %320 = vmatprep.subr.bf16.mxu0 0
    %321 = vmatpush1.bf16.msra.mxu0 0
    %322 = vmatprep.subr.bf16.mxu0 0
    %323 = vmatpush1.bf16.msra.mxu0 0
    %324 = vmatprep.subr.bf16.mxu0 0
    %325 = vmatpush1.bf16.msra.mxu0 0
    %326 = vmatprep.subr.bf16.mxu0 0
    %327 = vmatpush1.bf16.msra.mxu0 0
    %328 = vmatprep.subr.bf16.mxu0 0
    %329 = vmatpush1.bf16.msra.mxu0 0
    %330 = vmatprep.mubr.bf16.mxu0 0
    %331 = vmatmul.mubr.bf16.gmra.mrb[0].mxu0 %v296
    %v332 = vpop.f32.mrb[0].mxu0
    %v333 = vadd.f32 %v287, %v332
    %v334 = vpop.f32.mrb[0].mxu0
    %v335 = vpop.f32.mrb[0].mxu0
    %v336 = vadd.f32 %v291, %v335
    %v337 = vpop.f32.mrb[0].mxu0
    %338 = vdwg.mxu0
    %v339 = vmul.f32 %v333, 0.5
    %v340 = vmul.f32 %v336, 0.5
    %v341 = vmul.f32 %v333, 0.044715
    %v342 = vmul.f32 %v336, 0.044715
    %v343 = vmul.f32 %v341, %v333
    %v344 = vmul.f32 %v342, %v336
    %v345 = vmul.f32 %v343, %v333
    %v346 = vmul.f32 %v344, %v336
    %v347 = vadd.f32 %v333, %v345
    %v348 = vadd.f32 %v336, %v346
    %v349 = vmul.f32 %v347, 0.7978846
    %v350 = vmul.f32 %v348, 0.7978846
    %v351 = vtanh.pop %v349
    %v352 = vtanh.pop %v350
    %v353 = vadd.f32 %v351, 1.0
    %v354 = vadd.f32 %v352, 1.0
    %v355 = vmul.f32 %v339, %v353
    %v356 = vmul.f32 %v340, %v354
    %v357 = vadd.f32 %v282, %v355
    %v358 = vadd.f32 %v283, %v356
    %359 = vrot.lane.b32.xlu0 %v23, 74
    %v360 = vpop.permute.xlu0 %359
    %361 = vrot.lane.b32.xlu0 %v24, 74
    %v362 = vpop.permute.xlu0 %361
    %v365 = vmul.f32 %v357, %v360
    %v366 = vmul.f32 %v358, %v362
    %367 = vrot.lane.b32.xlu0 %v23, 70
    %v368 = vpop.permute.xlu0 %367
    %369 = vrot.lane.b32.xlu0 %v24, 70
    %v370 = vpop.permute.xlu0 %369
    %v373 = vadd.f32 %v365, %v368
    %v374 = vadd.f32 %v366, %v370
    %375 = vrot.lane.b32.xlu0 %v23, 66
    %v376 = vpop.permute.xlu0 %375
    %377 = vrot.lane.b32.xlu0 %v24, 66
    %v378 = vpop.permute.xlu0 %377
    %v381 = vmul.f32 %v373, %v376
    %v382 = vmul.f32 %v374, %v378
    %383 = vrot.lane.b32.xlu0 %v23, 62
    %v384 = vpop.permute.xlu0 %383
    %385 = vrot.lane.b32.xlu0 %v24, 62
    %v386 = vpop.permute.xlu0 %385
    %v389 = vadd.f32 %v381, %v384
    %v390 = vadd.f32 %v382, %v386
    %v391 = vpack.c.bf16 %v390, %v389
    %392 = vrot.lane.b32.xlu0 %v146, 60
    %v393 = vpop.permute.xlu0 %392
    %394 = vrot.lane.b32.xlu0 %v143, 58
    %v395 = vpop.permute.xlu0 %394
    %v398 = vsel %vm153, %v391, 0
    %v401 = vsel %vm157, %v393, 0
    %403 = vmatprep.subr.bf16.mxu0 0
    %404 = vmatpush1.bf16.msra.mxu0 %v401
    %405 = vmatprep.subr.bf16.mxu0 0
    %406 = vmatpush1.bf16.msra.mxu0 0
    %407 = vmatprep.subr.bf16.mxu0 0
    %408 = vmatpush1.bf16.msra.mxu0 0
    %409 = vmatprep.subr.bf16.mxu0 0
    %410 = vmatpush1.bf16.msra.mxu0 0
    %411 = vmatprep.subr.bf16.mxu0 0
    %412 = vmatpush1.bf16.msra.mxu0 0
    %413 = vmatprep.subr.bf16.mxu0 0
    %414 = vmatpush1.bf16.msra.mxu0 0
    %415 = vmatprep.subr.bf16.mxu0 0
    %416 = vmatpush1.bf16.msra.mxu0 0
    %417 = vmatprep.subr.bf16.mxu0 0
    %418 = vmatpush1.bf16.msra.mxu0 0
    %419 = vmatprep.subr.bf16.mxu0 0
    %420 = vmatpush1.bf16.msra.mxu0 0
    %421 = vmatprep.subr.bf16.mxu0 0
    %422 = vmatpush1.bf16.msra.mxu0 0
    %423 = vmatprep.subr.bf16.mxu0 0
    %424 = vmatpush1.bf16.msra.mxu0 0
    %425 = vmatprep.subr.bf16.mxu0 0
    %426 = vmatpush1.bf16.msra.mxu0 0
    %427 = vmatprep.subr.bf16.mxu0 0
    %428 = vmatpush1.bf16.msra.mxu0 0
    %429 = vmatprep.subr.bf16.mxu0 0
    %430 = vmatpush1.bf16.msra.mxu0 0
    %431 = vmatprep.subr.bf16.mxu0 0
    %432 = vmatpush1.bf16.msra.mxu0 0
    %433 = vmatprep.subr.bf16.mxu0 0
    %434 = vmatpush1.bf16.msra.mxu0 0
    %435 = vmatprep.mubr.bf16.mxu0 0
    %436 = vmatmul.mubr.bf16.gmra.mrb[0].mxu0 %v398
    %v437 = vpop.f32.mrb[0].mxu0
    %v438 = vadd.f32 %v395, %v437
    %v439 = vpop.f32.mrb[0].mxu0
    %v440 = vpop.f32.mrb[0].mxu0
    %v441 = vadd.f32 %v395, %v440
    %v442 = vpop.f32.mrb[0].mxu0
    %443 = vdwg.mxu0
    %v444 = vmul.f32 %v438, 0.5
    %v445 = vmul.f32 %v441, 0.5
    %v446 = vmul.f32 %v438, 0.044715
    %v447 = vmul.f32 %v441, 0.044715
    %v448 = vmul.f32 %v446, %v438
    %v449 = vmul.f32 %v447, %v441
    %v450 = vmul.f32 %v448, %v438
    %v451 = vmul.f32 %v449, %v441
    %v452 = vadd.f32 %v438, %v450
    %v453 = vadd.f32 %v441, %v451
    %v454 = vmul.f32 %v452, 0.7978846
    %v455 = vmul.f32 %v453, 0.7978846
    %v456 = vtanh.pop %v454
    %v457 = vtanh.pop %v455
    %v458 = vadd.f32 %v456, 1.0
    %v459 = vadd.f32 %v457, 1.0
    %v460 = vmul.f32 %v444, %v458
    %v461 = vmul.f32 %v445, %v459
    %v462 = vpack.c.bf16 %v461, %v460
    %463 = vrot.lane.b32.xlu0 %v41, 28
    %v464 = vpop.permute.xlu0 %463
    %465 = vrot.lane.b32.xlu0 %v225, 28
    %v466 = vpop.permute.xlu0 %465
    %v470 = vsel %vm232, %v462, 0
    %472 = vmatprep.subr.bf16.mxu0 0
    %473 = vmatpush1.bf16.msra.mxu0 %v464
    %474 = vmatprep.subr.bf16.mxu0 0
    %475 = vmatpush1.bf16.msra.mxu0 %v466
    %476 = vmatprep.subr.bf16.mxu0 0
    %477 = vmatpush1.bf16.msra.mxu0 0
    %478 = vmatprep.subr.bf16.mxu0 0
    %479 = vmatpush1.bf16.msra.mxu0 0
    %480 = vmatprep.subr.bf16.mxu0 0
    %481 = vmatpush1.bf16.msra.mxu0 0
    %482 = vmatprep.subr.bf16.mxu0 0
    %483 = vmatpush1.bf16.msra.mxu0 0
    %484 = vmatprep.subr.bf16.mxu0 0
    %485 = vmatpush1.bf16.msra.mxu0 0
    %486 = vmatprep.subr.bf16.mxu0 0
    %487 = vmatpush1.bf16.msra.mxu0 0
    %488 = vmatprep.subr.bf16.mxu0 0
    %489 = vmatpush1.bf16.msra.mxu0 0
    %490 = vmatprep.subr.bf16.mxu0 0
    %491 = vmatpush1.bf16.msra.mxu0 0
    %492 = vmatprep.subr.bf16.mxu0 0
    %493 = vmatpush1.bf16.msra.mxu0 0
    %494 = vmatprep.subr.bf16.mxu0 0
    %495 = vmatpush1.bf16.msra.mxu0 0
    %496 = vmatprep.subr.bf16.mxu0 0
    %497 = vmatpush1.bf16.msra.mxu0 0
    %498 = vmatprep.subr.bf16.mxu0 0
    %499 = vmatpush1.bf16.msra.mxu0 0
    %500 = vmatprep.subr.bf16.mxu0 0
    %501 = vmatpush1.bf16.msra.mxu0 0
    %502 = vmatprep.subr.bf16.mxu0 0
    %503 = vmatpush1.bf16.msra.mxu0 0
    %504 = vmatprep.mubr.bf16.mxu0 0
    %505 = vmatmul.mubr.bf16.gmra.mrb[0].mxu0 %v470
    %v506 = vpop.f32.mrb[0].mxu0
    %v507 = vadd.f32 0.0, %v506
    %v508 = vpop.f32.mrb[0].mxu0
    %v509 = vpop.f32.mrb[0].mxu0
    %v510 = vadd.f32 0.0, %v509
    %v511 = vpop.f32.mrb[0].mxu0
    %512 = vdwg.mxu0
    %v513 = vadd.f32 %v373, %v507
    %v514 = vadd.f32 %v374, %v510
    %515 = vrot.lane.b32.xlu0 %v143, 26
    %v516 = vpop.permute.xlu0 %515
    %v518 = vadd.f32 %v513, %v516
    %v519 = vadd.f32 %v514, %v516
    %v520 = vld [vmem:[%s1] sm:$0x1]
    %v521 = vpack.c.bf16 %v519, %v518
    %523 = vrot.lane.b32.xlu0 %v25, 22
    %v524 = vpop.permute.xlu0 %523
    %s525 = vtos %v524
    %v526 = vstv %s525
    %v529 = vunpack.c.l.b16 %v520
    %v530 = vpack.c.b16 %v529, %v529
    %531 = vrot.lane.b32.xlu0 %v530, 24
    %v532 = vpop.permute.xlu0 %531
    %v534 = vsel %vm42, %v532, 0
    %536 = vmatprep.subr.bf16.mxu0 0
    %537 = vmatpush1.bf16.msra.mxu0 %v521
    %538 = vmatprep.subr.bf16.mxu0 0
    %539 = vmatpush1.bf16.msra.mxu0 0
    %540 = vmatprep.subr.bf16.mxu0 0
    %541 = vmatpush1.bf16.msra.mxu0 0
    %542 = vmatprep.subr.bf16.mxu0 0
    %543 = vmatpush1.bf16.msra.mxu0 0
    %544 = vmatprep.subr.bf16.mxu0 0
    %545 = vmatpush1.bf16.msra.mxu0 0
    %546 = vmatprep.subr.bf16.mxu0 0
    %547 = vmatpush1.bf16.msra.mxu0 0
    %548 = vmatprep.subr.bf16.mxu0 0
    %549 = vmatpush1.bf16.msra.mxu0 0
    %550 = vmatprep.subr.bf16.mxu0 0
    %551 = vmatpush1.bf16.msra.mxu0 0
    %552 = vmatprep.subr.bf16.mxu0 0
    %553 = vmatpush1.bf16.msra.mxu0 0
    %554 = vmatprep.subr.bf16.mxu0 0
    %555 = vmatpush1.bf16.msra.mxu0 0
    %556 = vmatprep.subr.bf16.mxu0 0
    %557 = vmatpush1.bf16.msra.mxu0 0
    %558 = vmatprep.subr.bf16.mxu0 0
    %559 = vmatpush1.bf16.msra.mxu0 0
    %560 = vmatprep.subr.bf16.mxu0 0
    %561 = vmatpush1.bf16.msra.mxu0 0
    %562 = vmatprep.subr.bf16.mxu0 0
    %563 = vmatpush1.bf16.msra.mxu0 0
    %564 = vmatprep.subr.bf16.mxu0 0
    %565 = vmatpush1.bf16.msra.mxu0 0
    %566 = vmatprep.subr.bf16.mxu0 0
    %567 = vmatpush1.bf16.msra.mxu0 0
    %568 = vmatprep.mubr.bf16.mxu0 0
    %569 = vmatmul.mubr.bf16.gmra.mrb[0].mxu0 %v534
    %v570 = vpop.f32.mrb[0].mxu0
    %v571 = vadd.f32 %v526, %v570
    %v572 = vpop.f32.mrb[0].mxu0
    %v573 = vpop.f32.mrb[0].mxu0
    %v574 = vpop.f32.mrb[0].mxu0
    %575 = vdwg.mxu0
    %vm576 = vcmask 25600
    %577 = vst.msk [vmem:[#allocation2] sm:$0x3] %vm576, %v571
    // Predicated region
    $region14: #{tsmixer_forward.1} parent=1 // pred_check
      _
    $region15: #{tsmixer_forward.1} parent=1 // pred_check_branch
      %579 = sbr.rel (0) target = $region17
    $region16: #{tsmixer_forward.1} parent=1 // pred_region
      %s581 = ssub.s32 32, 32
      %582 = vsyncadd [#allocation3], %s581
      %s584 = sshll.u32 [#allocation2], 4
      %s585 = int_to_ptr.vmem [resolvable:$true] %s584
      %587 = dma.vmem_to_hbm [thread:$0]  %s585, 32, %s3, [#allocation3]
    $region17: #{tsmixer_forward.1} parent=1 // pred_fallthru
      _
    // Predicated region
    $region18: #{tsmixer_forward.1} parent=1 // pred_check
      _
    $region19: #{tsmixer_forward.1} parent=1 // pred_check_branch
      %589 = sbr.rel (0) target = $region21
    $region20: #{tsmixer_forward.1} parent=1 // pred_region
      %590 = dma.done [#allocation3], 32
    $region21: #{tsmixer_forward.1} parent=1 // pred_fallthru
      _
    %591 = vsyncpa [#allocation3], 1

</llo_original>
